<compile_context>
chip_gen: v6e
topology: v6e:2x2x1
jax: 0.10.0
libtpu: 0.0.40
codegen_flags: <defaults>
</compile_context>

<pallas_src>
import math
import functools

import jax
import jax.numpy as jnp
from jax.experimental import pallas as pl
from jax.experimental.pallas import tpu as pltpu


# ----------------------------- Pallas kernel --------------------------------

def _pe_add_kernel(x_ref, pe_ref, o_ref):
    # x_ref: [TB, TF] slab of x, pe_ref: [1, TF] positional-encoding slab.
    # pe broadcasts over the batch rows; store casts to the output dtype.
    o_ref[...] = (x_ref[...] + pe_ref[...]).astype(o_ref.dtype)


# ------------------------------ module glue ---------------------------------

def make_pe_buffer(max_len, d_model, dtype=jnp.float32):
    """Matches PyTorch's __init__ buffer construction (even d_model)."""
    # TODO(synk): odd d_model not supported (cos half shape-mismatches sin half).
    assert d_model % 2 == 0, "d_model must be even"
    position = jnp.arange(max_len, dtype=jnp.float32)[:, None]           # [L, 1]
    div_term = jnp.exp(
        jnp.arange(0, d_model, 2, dtype=jnp.float32)
        * (-(math.log(10000.0) / d_model)))                              # [D/2]
    angles = position * div_term[None, :]                                # [L, D/2]
    pe = jnp.zeros((max_len, d_model), jnp.float32)
    pe = pe.at[:, 0::2].set(jnp.sin(angles))
    pe = pe.at[:, 1::2].set(jnp.cos(angles))
    return pe.astype(dtype)                                              # [L, D]


# Target ~2 MiB per x/out block: double-buffered in + out + pe stays well
# inside the default scoped VMEM limit on v5e/v6e and v7x's 64 MiB VMEM.
_BLOCK_TARGET_BYTES = 2 * 1024 * 1024


@jax.jit
def positional_encoding(x, pe):
    """Forward: x + pe[:seq_len]  (nn.Dropout is identity in eval mode)."""
    # TODO(synk): nn.Dropout(p) omitted (eval-mode forward => identity).
    B, S, D = x.shape
    F = S * D
    itemsize = jnp.dtype(x.dtype).itemsize

    # Free reshapes (merge trailing dims) -> lane-dense last axis.
    x2 = x.reshape(B, F)
    pe2 = pe[:S, :].reshape(1, F)             # tiny constant slab
    if pe2.dtype != x.dtype:
        pe2 = pe2.astype(x.dtype)             # cast the small buffer, never x

    if B * F * itemsize <= _BLOCK_TARGET_BYTES:
        # Tiny problem: whole array as one lane-dense block, one grid step.
        tb, tf = B, F
        grid = (1, 1)
        x_map = lambda i, b: (0, 0)
        pe_map = lambda i, b: (0, 0)
    elif F % 128 == 0:
        # Tile the flattened (seq*feature) axis into ~2 MiB, 128-multiple blocks.
        tb = 1
        tf = min(F, max(128, (_BLOCK_TARGET_BYTES // itemsize) // 128 * 128))
        grid = (pl.cdiv(F, tf), B)            # F-tiles outer, batch innermost
        x_map = lambda i, b: (b, i)
        pe_map = lambda i, b: (0, i)          # constant across inner b -> reused
    else:
        # TODO(synk): S*D not a multiple of 128 — fall back to one full-row block.
        tb, tf = 1, F
        grid = (1, B)
        x_map = lambda i, b: (b, 0)
        pe_map = lambda i, b: (0, 0)

    out2 = pl.pallas_call(
        _pe_add_kernel,
        out_shape=jax.ShapeDtypeStruct((B, F), x.dtype),
        grid=grid,
        in_specs=[
            pl.BlockSpec((tb, tf), x_map),    # x slab (DMA'd each step)
            pl.BlockSpec((1, tf), pe_map),    # pe slab (reused across batch)
        ],
        out_specs=pl.BlockSpec((tb, tf), x_map),
        compiler_params=pltpu.CompilerParams(
            dimension_semantics=("parallel", "parallel")),
        cost_estimate=pl.CostEstimate(
            flops=B * F,
            transcendentals=0,
            bytes_accessed=(2 * B * F + F) * itemsize),
    )(x2, pe2)

    return out2.reshape(B, S, D)


# ----------------------------------- main -----------------------------------

if __name__ == "__main__":
    key = jax.random.PRNGKey(0)

    # --- small demo shapes consistent with the module (single-block path) ---
    B, S, D = 2, 8, 32
    MAX_LEN = 64
    x = jax.random.normal(key, (B, S, D), dtype=jnp.float32)
    pe = make_pe_buffer(MAX_LEN, D)                   # "register_buffer" at init

    out = positional_encoding(x, pe)
    jax.block_until_ready(out)

    ref = x + pe[None, :S, :]
    assert out.shape == (B, S, D), out.shape
    assert out.dtype == x.dtype
    assert bool(jnp.all(jnp.isfinite(out)))
    assert bool(jnp.allclose(out, ref, atol=1e-6, rtol=1e-6))

    # --- secondary check exercising the tiled (multi-block) path ------------
    B2, S2, D2 = 2, 2048, 512                         # F = 1,048,576 -> 2 tiles/row
    key2 = jax.random.PRNGKey(0)
    x2 = jax.random.normal(key2, (B2, S2, D2), dtype=jnp.float32)
    pe2 = make_pe_buffer(S2, D2)

    out2 = positional_encoding(x2, pe2)
    jax.block_until_ready(out2)
    ref2 = x2 + pe2[None, :S2, :]
    assert out2.shape == (B2, S2, D2)
    assert bool(jnp.allclose(out2, ref2, atol=1e-6, rtol=1e-6))

    print("KERNEL_OK")
</pallas_src>

<mosaic_0001>
module attributes {stable_mosaic.version = 11 : i64} {
  func.func @_pe_add_kernel(%arg0: i32, %arg1: i32, %arg2: memref<2x256xf32, #tpu.memory_space<vmem>>, %arg3: memref<1x256xf32, #tpu.memory_space<vmem>>, %arg4: memref<2x256xf32, #tpu.memory_space<vmem>>) attributes {dimension_semantics = [#tpu.dimension_semantics<parallel>, #tpu.dimension_semantics<parallel>], iteration_bounds = array<i64: 1, 1>, scalar_prefetch = 0 : i64, scratch_operands = 0 : i64, tpu.core_type = #tpu.core_type<tc>, window_params = [{pipeline_mode = #tpu.pipeline_mode<synchronous>, transform_indices = @transform_0, window_bounds = array<i64: 2, 256>}, {pipeline_mode = #tpu.pipeline_mode<synchronous>, transform_indices = @transform_1, window_bounds = array<i64: 1, 256>}, {pipeline_mode = #tpu.pipeline_mode<synchronous>, transform_indices = @transform_2, window_bounds = array<i64: 2, 256>}]} {
    %c0 = arith.constant 0 : index
    %c0_0 = arith.constant 0 : index
    %0 = vector.load %arg2[%c0, %c0_0] : memref<2x256xf32, #tpu.memory_space<vmem>>, vector<2x256xf32>
    %c0_1 = arith.constant 0 : index
    %c0_2 = arith.constant 0 : index
    %1 = vector.load %arg3[%c0_1, %c0_2] : memref<1x256xf32, #tpu.memory_space<vmem>>, vector<1x256xf32>
    %2 = vector.broadcast %1 : vector<1x256xf32> to vector<2x256xf32>
    %3 = arith.addf %0, %2 : vector<2x256xf32>
    %c0_3 = arith.constant 0 : index
    %c0_4 = arith.constant 0 : index
    %4 = vector.load %arg4[%c0_3, %c0_4] : memref<2x256xf32, #tpu.memory_space<vmem>>, vector<2x256xf32>
    tpu.vector_store %arg4[%c0_3, %c0_4], %3 {strides = array<i32>} : memref<2x256xf32, #tpu.memory_space<vmem>>, vector<2x256xf32>,
    return
  }
  func.func @transform_0(%arg0: i32, %arg1: i32) -> (i32, i32) {
    %c0_i32 = arith.constant 0 : i32
    %c0_i32_0 = arith.constant 0 : i32
    %c0_i32_1 = arith.constant 0 : i32
    return %c0_i32, %c0_i32_0 : i32, i32
  }
  func.func @transform_1(%arg0: i32, %arg1: i32) -> (i32, i32) {
    %c0_i32 = arith.constant 0 : i32
    %c0_i32_0 = arith.constant 0 : i32
    %c0_i32_1 = arith.constant 0 : i32
    return %c0_i32, %c0_i32_0 : i32, i32
  }
  func.func @transform_2(%arg0: i32, %arg1: i32) -> (i32, i32) {
    %c0_i32 = arith.constant 0 : i32
    %c0_i32_0 = arith.constant 0 : i32
    %c0_i32_1 = arith.constant 0 : i32
    return %c0_i32, %c0_i32_0 : i32, i32
  }
}

</mosaic_0001>

<llo_original>
// kernel: positional_encoding.1
$region0: #{positional_encoding.1}
  #allocation0 [shape = 'u32[]', space=smem, size = 0x4, offset = 0x4, fixed_abs, tag = 'smem constant byte address 0x4 - core index']
  #allocation1 [shape = 'u32[144,128]{1,0:T(1,128)}', space=vmem, size = 0x12000, scoped, tag = 'internal scratch']
  %s0 = inlined_call_operand.vmem [shape: f32[2,256], index: 0, kind: input, shape index: {}]
  %s1 = inlined_call_operand.vmem [shape: f32[1,256], index: 1, kind: input, shape index: {}]
  %s2 = inlined_call_operand.vmem [shape: f32[2,256], index: 2, kind: output, shape index: {}]
  %s3 = sld [smem:[#allocation0]]
  $region18: #{positional_encoding.1} parent=0
    _
  %s5 = ssub.s32 1, %s3
  %s6 = scalar_select 0, %s5, %s3
  // Predicated region
  $region2: #{positional_encoding.1} parent=0 // pred_check
    _
  $region3: #{positional_encoding.1} parent=0 // pred_check_branch
    %8 = sbr.rel (0) target = $region5
  $region4: #{positional_encoding.1} parent=0 // pred_region
    _
  $region5: #{positional_encoding.1} parent=0 // pred_fallthru
    _
  // Predicated region
  $region6: #{positional_encoding.1} parent=0 // pred_check
    _
  $region7: #{positional_encoding.1} parent=0 // pred_check_branch
    %10 = sbr.rel (0) target = $region9
  $region8: #{positional_encoding.1} parent=0 // pred_region
    _
  $region9: #{positional_encoding.1} parent=0 // pred_fallthru
    _
  %v11 = vld [vmem:[%s0] sm:$0xf]
  %v12 = vld [vmem:[%s1] sm:$0x3]
  %v14 = vlaneseq
  %v15 = vshrl.u32 %v14, 7
  %v16 = vsub.s32 0, %v15
  %v17 = vrot.slane %v12, %v16
  %v18 = vlaneseq
  %v19 = vshrl.u32 %v18, 7
  %v20 = vsub.s32 1, %v19
  %v21 = vrot.slane %v12, %v20
  %v22 = vcombine.low %v17, %v21
  %v24 = vunpack.c.l.s4 1983009808
  %v25 = vunpack.c.0.s8 %v24
  %v26 = vlaneseq
  %v27 = vshrl.u32 %v26, 7
  %v28 = vsub.s32 %v25, %v27
  %v29 = vrot.slane %v22, %v28
  %v31 = vadd.f32 %v11, %v29
  %32 = vst [vmem:[%s2] sm:$0xf] %v31
  // Predicated region
  $region10: #{positional_encoding.1} parent=0 // pred_check
    _
  $region11: #{positional_encoding.1} parent=0 // pred_check_branch
    %34 = sbr.rel (0) target = $region13
  $region12: #{positional_encoding.1} parent=0 // pred_region
    _
  $region13: #{positional_encoding.1} parent=0 // pred_fallthru
    _
  // Predicated region
  $region14: #{positional_encoding.1} parent=0 // pred_check
    _
  $region15: #{positional_encoding.1} parent=0 // pred_check_branch
    %36 = sbr.rel (0) target = $region17
  $region16: #{positional_encoding.1} parent=0 // pred_region
    _
  $region17: #{positional_encoding.1} parent=0 // pred_fallthru
    _

</llo_original>
